<compile_context>
chip_gen: v7x
topology: tpu7x:2x2x1
jax: 0.10.0
libtpu: 0.0.40
codegen_flags: <defaults>
</compile_context>

<pallas_src>
import jax
import jax.numpy as jnp
from jax import lax
from jax.experimental import pallas as pl
from jax.experimental.pallas import tpu as pltpu


def _mish(x):
    # mish(x) = x * (1 - 2 / ((1 + e^x)^2 + 1)); one exp + one exact recip.
    # With the clamp at 30, (1 - 2/(t*t+1)) rounds to exactly 1.0f on the
    # clamped branch, so x * inner == x and no large-x select is needed.
    e = jnp.exp(jnp.minimum(x, 30.0))
    t = 1.0 + e
    return x * (1.0 - 2.0 / (t * t + 1.0))


def clf_kernel(x_ref, w1_ref, b1_ref, w2_ref, b2_ref, w3_ref, b3_ref, o_ref):
    # x tile in native (tb, D) layout; cast on-chip to the MXU compute dtype
    # (cheap VPU cast that overlaps with the MXU, no extra HBM traffic).
    xv = x_ref[...].astype(w1_ref.dtype)

    # fc1 + mish: contract D of W1 (H, D) with D of x (tb, D) -> (H, tb).
    h1 = lax.dot_general(
        w1_ref[...], xv,
        dimension_numbers=(((1,), (1,)), ((), ())),
        preferred_element_type=jnp.float32,
    ) + b1_ref[...]
    h1 = _mish(h1)

    # fc2 + mish: (H2, H) @ (H, tb) -> (H2, tb).
    h2 = jnp.dot(w2_ref[...], h1.astype(w2_ref.dtype),
                 preferred_element_type=jnp.float32) + b2_ref[...]
    h2 = _mish(h2)

    # fc3 (H2 -> 1): single (1, H2) @ (H2, tb) MXU pass (MXU is otherwise
    # idle here); b3 is a scalar read from SMEM.
    z = jnp.dot(w3_ref[...], h2.astype(w3_ref.dtype),
                preferred_element_type=jnp.float32) + b3_ref[0]

    # sigmoid(z) = 1 / (1 + exp(-z)).  Output magnitude <= 1, so the approx
    # EUP reciprocal's ~2^-12 relative error is safely inside tolerance.
    e = jnp.exp(jnp.minimum(-z, 30.0))
    o_ref[...] = pl.reciprocal(1.0 + e, approx=True)


def _pick_batch_tile(B, cap=2048):
    """Pick the lane-axis (batch) tile.

    Tiny batches (< 256): one grid step covering the whole batch.  Below 128
    most lanes are idle and the call is dominated by fixed launch/pipeline
    overhead; batch more requests / pad the lane axis upstream rather than
    tuning the kernel.  Otherwise: the largest multiple of 128 that divides B,
    capped so there are at least 2 grid steps (lets the 'parallel' axis split
    across v7x's two TensorCores) and per-step intermediates stay well inside
    the scoped VMEM limit even at hidden_dim=512.
    """
    if B < 256:
        return B
    t = min(cap, B // 2)
    t = (t // 128) * 128
    while t >= 128:
        if B % t == 0:
            return t
        t -= 128
    return B


def clf_forward(x, params, *, tb=None, compute_dtype=jnp.bfloat16):
    """x: (B, D).  params in PyTorch nn.Linear layout:
    w1 (H, D), b1 (H,), w2 (H2, H), b2 (H2,), w3 (O, H2), b3 (O,).
    Returns (B, O) = sigmoid(fc3(mish(fc2(mish(fc1(x))))))."""
    w1, b1, w2, b2, w3, b3 = params
    B, D = x.shape
    H = w1.shape[0]
    H2 = w2.shape[0]
    O = w3.shape[0]
    assert O == 1, "SMEM-scalar b3 path assumes output_dim == 1 (module spec)"

    if tb is None:
        tb = _pick_batch_tile(B)
    assert B % tb == 0, "batch tile must divide B"
    grid = (B // tb,)

    # Weights are tiny and grid-resident: pre-cast once to the compute dtype.
    w1c = w1.astype(compute_dtype)
    w2c = w2.astype(compute_dtype)
    w3c = w3.astype(compute_dtype)
    # Biases stay f32 (added to f32 accumulators) as lane-broadcast columns.
    b1c = b1.reshape(H, 1).astype(jnp.float32)
    b2c = b2.reshape(H2, 1).astype(jnp.float32)
    b3c = b3.reshape(O).astype(jnp.float32)          # scalar -> SMEM

    const = lambda i: (0, 0)

    out_t = pl.pallas_call(
        clf_kernel,
        out_shape=jax.ShapeDtypeStruct((O, B), jnp.float32),
        grid_spec=pltpu.PrefetchScalarGridSpec(
            num_scalar_prefetch=0,
            grid=grid,
            in_specs=[
                pl.BlockSpec((tb, D), lambda i: (i, 0)),   # x, native (B, D)
                pl.BlockSpec((H, D), const),               # W1
                pl.BlockSpec((H, 1), const),               # b1 column
                pl.BlockSpec((H2, H), const),              # W2
                pl.BlockSpec((H2, 1), const),              # b2 column
                pl.BlockSpec((O, H2), const),              # W3 (native layout)
                pl.BlockSpec(memory_space=pltpu.MemorySpace.SMEM),  # b3 scalar
            ],
            out_specs=pl.BlockSpec((O, tb), lambda i: (0, i)),  # lane-dense
        ),
        compiler_params=pltpu.CompilerParams(
            dimension_semantics=("parallel",),
            vmem_limit_bytes=64 * 1024 * 1024,
        ),
        # TODO(synk): pipeline_mode=pl.Buffered(1) on the constant weight/bias
        # specs would halve their (tiny) double-buffer footprint; skipped to
        # keep the lowering maximally portable.
    )(x, w1c, b1c, w2c, b2c, w3c, b3c)

    return out_t.T                                   # (B, O)


def init_params(key, input_dim, hidden_dim, output_dim):
    """Deterministic init matching CLF.__init__ shapes (PyTorch layout)."""
    h2 = hidden_dim // 2
    ks = jax.random.split(key, 6)
    w1 = jax.random.normal(ks[0], (hidden_dim, input_dim), jnp.float32) * 0.1
    b1 = jax.random.normal(ks[1], (hidden_dim,), jnp.float32) * 0.1
    w2 = jax.random.normal(ks[2], (h2, hidden_dim), jnp.float32) * 0.1
    b2 = jax.random.normal(ks[3], (h2,), jnp.float32) * 0.1
    w3 = jax.random.normal(ks[4], (output_dim, h2), jnp.float32) * 0.1
    b3 = jax.random.normal(ks[5], (output_dim,), jnp.float32) * 0.1
    return (w1, b1, w2, b2, w3, b3)


def clf_reference(x, params):
    """Exact reference (matches the PyTorch module math in f32)."""
    w1, b1, w2, b2, w3, b3 = params
    mish = lambda v: v * jnp.tanh(jax.nn.softplus(v))
    h1 = mish(x @ w1.T + b1)
    h2 = mish(h1 @ w2.T + b2)
    return jax.nn.sigmoid(h2 @ w3.T + b3)


if __name__ == "__main__":
    key = jax.random.PRNGKey(0)
    kx, kp, kx2, kp2 = jax.random.split(key, 4)

    # Small shapes consistent with the module: batch=16, input_dim=32,
    # hidden_dim=32 (hidden_dim // 2 = 16), output_dim=1.
    batch, input_dim, hidden_dim, output_dim = 16, 32, 32, 1
    x = jax.random.normal(kx, (batch, input_dim), jnp.float32)
    params = init_params(kp, input_dim, hidden_dim, output_dim)
    ref = clf_reference(x, params)

    # f32 compute path: tight check against the exact reference.
    out_f32 = jax.block_until_ready(
        clf_forward(x, params, compute_dtype=jnp.float32))
    assert out_f32.shape == (batch, output_dim)
    assert jnp.allclose(out_f32, ref, atol=2e-3, rtol=2e-3), "f32 mismatch"

    # Default bf16-MXU path: looser tolerance (bf16 mantissa on matmul inputs).
    out_bf16 = jax.block_until_ready(clf_forward(x, params))
    assert out_bf16.shape == (batch, output_dim)
    assert jnp.allclose(out_bf16, ref, atol=2e-2, rtol=2e-2), "bf16 mismatch"

    # Multi-step grid path: B=256 -> tb=128, grid=(2,) 'parallel' steps.
    batch2, hidden2 = 256, 64
    x2 = jax.random.normal(kx2, (batch2, input_dim), jnp.float32)
    params2 = init_params(kp2, input_dim, hidden2, output_dim)
    out2 = jax.block_until_ready(clf_forward(x2, params2))
    assert out2.shape == (batch2, output_dim)
    assert jnp.allclose(out2, clf_reference(x2, params2),
                        atol=2e-2, rtol=2e-2), "tiled-path mismatch"

    print("KERNEL_OK")
</pallas_src>

<mosaic_0001>
module attributes {stable_mosaic.version = 11 : i64} {
  func.func @clf_kernel(%arg0: i32, %arg1: memref<16x32xf32, #tpu.memory_space<vmem>>, %arg2: memref<32x32xf32, #tpu.memory_space<vmem>>, %arg3: memref<32x1xf32, #tpu.memory_space<vmem>>, %arg4: memref<16x32xf32, #tpu.memory_space<vmem>>, %arg5: memref<16x1xf32, #tpu.memory_space<vmem>>, %arg6: memref<1x16xf32, #tpu.memory_space<vmem>>, %arg7: memref<1xf32, #tpu.memory_space<smem>>, %arg8: memref<1x16xf32, #tpu.memory_space<vmem>>) attributes {dimension_semantics = [#tpu.dimension_semantics<parallel>], iteration_bounds = array<i64: 1>, scalar_prefetch = 0 : i64, scratch_operands = 0 : i64, tpu.core_type = #tpu.core_type<tc>, window_params = [{transform_indices = @transform_0, window_bounds = array<i64: 16, 32>}, {pipeline_mode = #tpu.pipeline_mode<synchronous>, transform_indices = @transform_1, window_bounds = array<i64: 32, 32>}, {pipeline_mode = #tpu.pipeline_mode<synchronous>, transform_indices = @transform_2, window_bounds = array<i64: 32, 1>}, {pipeline_mode = #tpu.pipeline_mode<synchronous>, transform_indices = @transform_3, window_bounds = array<i64: 16, 32>}, {pipeline_mode = #tpu.pipeline_mode<synchronous>, transform_indices = @transform_4, window_bounds = array<i64: 16, 1>}, {pipeline_mode = #tpu.pipeline_mode<synchronous>, transform_indices = @transform_5, window_bounds = array<i64: 1, 16>}, {transform_indices = @transform_6, window_bounds = array<i64: 1>}, {transform_indices = @transform_7, window_bounds = array<i64: 1, 16>}]} {
    %c0 = arith.constant 0 : index
    %c0_0 = arith.constant 0 : index
    %0 = vector.load %arg1[%c0, %c0_0] : memref<16x32xf32, #tpu.memory_space<vmem>>, vector<16x32xf32>
    %c0_1 = arith.constant 0 : index
    %c0_2 = arith.constant 0 : index
    %1 = vector.load %arg2[%c0_1, %c0_2] : memref<32x32xf32, #tpu.memory_space<vmem>>, vector<32x32xf32>
    %cst = arith.constant dense<0.000000e+00> : vector<32x16xf32>
    %2 = tpu.matmul %1, %0, %cst {dimension_numbers = #tpu.dot_dimension_numbers<[1], [1], [0], [0], [0, 0, 1, 0], [], []>} : vector<32x32xf32>, vector<16x32xf32>, vector<32x16xf32> -> vector<32x16xf32>
    %c0_3 = arith.constant 0 : index
    %c0_4 = arith.constant 0 : index
    %3 = vector.load %arg3[%c0_3, %c0_4] : memref<32x1xf32, #tpu.memory_space<vmem>>, vector<32x1xf32>
    %4 = vector.broadcast %3 : vector<32x1xf32> to vector<32x16xf32>
    %5 = arith.addf %2, %4 : vector<32x16xf32>
    %cst_5 = arith.constant 3.000000e+01 : f32
    %6 = vector.broadcast %cst_5 : f32 to vector<32x16xf32>
    %7 = arith.minimumf %5, %6 : vector<32x16xf32>
    %8 = math.exp %7 : vector<32x16xf32>
    %cst_6 = arith.constant 1.000000e+00 : f32
    %9 = vector.broadcast %cst_6 : f32 to vector<32x16xf32>
    %10 = arith.addf %9, %8 : vector<32x16xf32>
    %11 = arith.mulf %10, %10 : vector<32x16xf32>
    %cst_7 = arith.constant 1.000000e+00 : f32
    %12 = vector.broadcast %cst_7 : f32 to vector<32x16xf32>
    %13 = arith.addf %11, %12 : vector<32x16xf32>
    %cst_8 = arith.constant 2.000000e+00 : f32
    %14 = vector.broadcast %cst_8 : f32 to vector<32x16xf32>
    %15 = arith.divf %14, %13 : vector<32x16xf32>
    %cst_9 = arith.constant 1.000000e+00 : f32
    %16 = vector.broadcast %cst_9 : f32 to vector<32x16xf32>
    %17 = arith.subf %16, %15 : vector<32x16xf32>
    %18 = arith.mulf %5, %17 : vector<32x16xf32>
    %c0_10 = arith.constant 0 : index
    %c0_11 = arith.constant 0 : index
    %19 = vector.load %arg4[%c0_10, %c0_11] : memref<16x32xf32, #tpu.memory_space<vmem>>, vector<16x32xf32>
    %cst_12 = arith.constant dense<0.000000e+00> : vector<16x16xf32>
    %20 = tpu.matmul %19, %18, %cst_12 {dimension_numbers = #tpu.dot_dimension_numbers<[1], [0], [0], [1], [0, 0, 1, 1], [], []>} : vector<16x32xf32>, vector<32x16xf32>, vector<16x16xf32> -> vector<16x16xf32>
    %c0_13 = arith.constant 0 : index
    %c0_14 = arith.constant 0 : index
    %21 = vector.load %arg5[%c0_13, %c0_14] : memref<16x1xf32, #tpu.memory_space<vmem>>, vector<16x1xf32>
    %22 = vector.broadcast %21 : vector<16x1xf32> to vector<16x16xf32>
    %23 = arith.addf %20, %22 : vector<16x16xf32>
    %cst_15 = arith.constant 3.000000e+01 : f32
    %24 = vector.broadcast %cst_15 : f32 to vector<16x16xf32>
    %25 = arith.minimumf %23, %24 : vector<16x16xf32>
    %26 = math.exp %25 : vector<16x16xf32>
    %cst_16 = arith.constant 1.000000e+00 : f32
    %27 = vector.broadcast %cst_16 : f32 to vector<16x16xf32>
    %28 = arith.addf %27, %26 : vector<16x16xf32>
    %29 = arith.mulf %28, %28 : vector<16x16xf32>
    %cst_17 = arith.constant 1.000000e+00 : f32
    %30 = vector.broadcast %cst_17 : f32 to vector<16x16xf32>
    %31 = arith.addf %29, %30 : vector<16x16xf32>
    %cst_18 = arith.constant 2.000000e+00 : f32
    %32 = vector.broadcast %cst_18 : f32 to vector<16x16xf32>
    %33 = arith.divf %32, %31 : vector<16x16xf32>
    %cst_19 = arith.constant 1.000000e+00 : f32
    %34 = vector.broadcast %cst_19 : f32 to vector<16x16xf32>
    %35 = arith.subf %34, %33 : vector<16x16xf32>
    %36 = arith.mulf %23, %35 : vector<16x16xf32>
    %c0_20 = arith.constant 0 : index
    %c0_21 = arith.constant 0 : index
    %37 = vector.load %arg6[%c0_20, %c0_21] : memref<1x16xf32, #tpu.memory_space<vmem>>, vector<1x16xf32>
    %cst_22 = arith.constant dense<0.000000e+00> : vector<1x16xf32>
    %38 = tpu.matmul %37, %36, %cst_22 {dimension_numbers = #tpu.dot_dimension_numbers<[1], [0], [0], [1], [0, 0, 1, 1], [], []>} : vector<1x16xf32>, vector<16x16xf32>, vector<1x16xf32> -> vector<1x16xf32>
    %c0_23 = arith.constant 0 : index
    %39 = memref.load %arg7[%c0_23] : memref<1xf32, #tpu.memory_space<smem>>
    %40 = vector.broadcast %39 : f32 to vector<1x16xf32>
    %41 = arith.addf %38, %40 : vector<1x16xf32>
    %cst_24 = arith.constant 0.000000e+00 : f32
    %42 = vector.broadcast %cst_24 : f32 to vector<1x16xf32>
    %43 = arith.subf %42, %41 : vector<1x16xf32>
    %cst_25 = arith.constant 3.000000e+01 : f32
    %44 = vector.broadcast %cst_25 : f32 to vector<1x16xf32>
    %45 = arith.minimumf %43, %44 : vector<1x16xf32>
    %46 = math.exp %45 : vector<1x16xf32>
    %cst_26 = arith.constant 1.000000e+00 : f32
    %47 = vector.broadcast %cst_26 : f32 to vector<1x16xf32>
    %48 = arith.addf %47, %46 : vector<1x16xf32>
    %49 = tpu.reciprocal %48 {approx = true} : vector<1x16xf32> -> vector<1x16xf32>
    %c0_27 = arith.constant 0 : index
    %c0_28 = arith.constant 0 : index
    %50 = vector.load %arg8[%c0_27, %c0_28] : memref<1x16xf32, #tpu.memory_space<vmem>>, vector<1x16xf32>
    tpu.vector_store %arg8[%c0_27, %c0_28], %49 {strides = array<i32>} : memref<1x16xf32, #tpu.memory_space<vmem>>, vector<1x16xf32>,
    return
  }
  func.func @transform_0(%arg0: i32) -> (i32, i32) {
    %c0_i32 = arith.constant 0 : i32
    %c0_i32_0 = arith.constant 0 : i32
    return %arg0, %c0_i32 : i32, i32
  }
  func.func @transform_1(%arg0: i32) -> (i32, i32) {
    %c0_i32 = arith.constant 0 : i32
    %c0_i32_0 = arith.constant 0 : i32
    %c0_i32_1 = arith.constant 0 : i32
    return %c0_i32, %c0_i32_0 : i32, i32
  }
  func.func @transform_2(%arg0: i32) -> (i32, i32) {
    %c0_i32 = arith.constant 0 : i32
    %c0_i32_0 = arith.constant 0 : i32
    %c0_i32_1 = arith.constant 0 : i32
    return %c0_i32, %c0_i32_0 : i32, i32
  }
  func.func @transform_3(%arg0: i32) -> (i32, i32) {
    %c0_i32 = arith.constant 0 : i32
    %c0_i32_0 = arith.constant 0 : i32
    %c0_i32_1 = arith.constant 0 : i32
    return %c0_i32, %c0_i32_0 : i32, i32
  }
  func.func @transform_4(%arg0: i32) -> (i32, i32) {
    %c0_i32 = arith.constant 0 : i32
    %c0_i32_0 = arith.constant 0 : i32
    %c0_i32_1 = arith.constant 0 : i32
    return %c0_i32, %c0_i32_0 : i32, i32
  }
  func.func @transform_5(%arg0: i32) -> (i32, i32) {
    %c0_i32 = arith.constant 0 : i32
    %c0_i32_0 = arith.constant 0 : i32
    %c0_i32_1 = arith.constant 0 : i32
    return %c0_i32, %c0_i32_0 : i32, i32
  }
  func.func @transform_6(%arg0: i32) -> i32 {
    %c0_i32 = arith.constant 0 : i32
    %c0_i32_0 = arith.constant 0 : i32
    return %c0_i32 : i32
  }
  func.func @transform_7(%arg0: i32) -> (i32, i32) {
    %c0_i32 = arith.constant 0 : i32
    %c0_i32_0 = arith.constant 0 : i32
    return %c0_i32, %arg0 : i32, i32
  }
}

</mosaic_0001>

<llo_original>
// kernel: tpu_custom_call.1
$region0: #{tpu_custom_call.1}
  #allocation0 [shape = 'u32[]', space=smem, size = 0x4, offset = 0x4, fixed_abs, tag = 'smem constant byte address 0x4 - core index']
  #allocation1 [shape = 'u32[144,128]{1,0:T(1,128)}', space=vmem, size = 0x12000, scoped, tag = 'internal scratch']
  #allocation2 [shape = 'f32[1]{0:T(128)S(6)}', space=smem, size = 0x200, scoped, tag = 'scoped memory for tpu_custom_call.1']
  %s0 = inlined_call_operand.hbm [shape: f32[16,32], index: 0, kind: input, shape index: {}]
  %s1 = inlined_call_operand.hbm [shape: f32[32,32], index: 1, kind: input, shape index: {}]
  %s2 = inlined_call_operand.hbm [shape: f32[32,1], index: 2, kind: input, shape index: {}]
  %s3 = inlined_call_operand.hbm [shape: f32[16,32], index: 3, kind: input, shape index: {}]
  %s4 = inlined_call_operand.hbm [shape: f32[16,1], index: 4, kind: input, shape index: {}]
  %s5 = inlined_call_operand.hbm [shape: f32[1,16], index: 5, kind: input, shape index: {}]
  %s6 = inlined_call_operand.<no memory space> [shape: f32[1], index: 6, kind: input, shape index: {}]
  %s7 = inlined_call_operand.hbm [shape: f32[1,16], index: 7, kind: output, shape index: {}]
  %s8 = sld [smem:[#allocation0]]
  $region62: #{tpu_custom_call.1} parent=0
    _
  %s10 = ssub.s32 1, %s8
  %s11 = scalar_select 0, %s10, %s8
  %12 = sst [smem:[#allocation2]] %s6
  $region1: #{tpu_custom_call.1} parent=0
    #allocation3 [shape = 'u8[8192]{0}', space=vmem, size = 0x2000, scoped, tag = 'input window, operand 0, single buffered']
    #allocation4 [shape = 's32[1]{0}', space=sflag, size = 0x4, scoped, tag = 'scoped memory for tpu_custom_call.1']
    #allocation5 [shape = 's32[1]{0}', space=sflag, size = 0x4, scoped, tag = 'scoped memory for tpu_custom_call.1']
    #allocation6 [shape = 'u8[16384]{0}', space=vmem, size = 0x4000, scoped, tag = 'input window, operand 1, single buffered']
    #allocation7 [shape = 's32[1]{0}', space=sflag, size = 0x4, scoped, tag = 'scoped memory for tpu_custom_call.1']
    #allocation8 [shape = 'u8[16384]{0}', space=vmem, size = 0x4000, scoped, tag = 'input window, operand 2, single buffered']
    #allocation9 [shape = 'u8[8192]{0}', space=vmem, size = 0x2000, scoped, tag = 'input window, operand 3, single buffered']
    #allocation10 [shape = 's32[1]{0}', space=sflag, size = 0x4, scoped, tag = 'scoped memory for tpu_custom_call.1']
    #allocation11 [shape = 'u8[8192]{0}', space=vmem, size = 0x2000, scoped, tag = 'input window, operand 4, single buffered']
    #allocation12 [shape = 'u8[512]{0}', space=vmem, size = 0x400, scoped, tag = 'input window, operand 5, single buffered']
    #allocation13 [shape = 's32[1]{0}', space=sflag, size = 0x4, scoped, tag = 'scoped memory for tpu_custom_call.1']
    #allocation14 [shape = 'u8[512]{0}', space=vmem, size = 0x400, scoped, tag = 'output window, operand 0, single buffered']
    %13 = vsyncpa [#allocation4], 0
    %14 = vsyncpa [#allocation7], 0
    %15 = vsyncpa [#allocation10], 0
    %16 = vsyncpa [#allocation13], 0
    %17 = vsyncpa [#allocation5], 0
    // Predicated region
    $region2: #{tpu_custom_call.1} parent=1 // pred_check
      _
    $region3: #{tpu_custom_call.1} parent=1 // pred_check_branch
      %19 = sbr.rel (0) target = $region5
    $region4: #{tpu_custom_call.1} parent=1 // pred_region
      %s21 = ssub.s32 256, 256
      %22 = vsyncadd [#allocation4], %s21
      %s23 = sshll.u32 [#allocation3], 4
      %s24 = int_to_ptr.vmem [resolvable:$true] %s23
      %29 = dma.hbm_to_vmem [thread:$0]  %s0, 256, %s24, [#allocation4], 128, 128, 8
    $region5: #{tpu_custom_call.1} parent=1 // pred_fallthru
      _
    // Predicated region
    $region6: #{tpu_custom_call.1} parent=1 // pred_check
      _
    $region7: #{tpu_custom_call.1} parent=1 // pred_check_branch
      %31 = sbr.rel (0) target = $region9
    $region8: #{tpu_custom_call.1} parent=1 // pred_region
      %s33 = ssub.s32 512, 512
      %34 = vsyncadd [#allocation7], %s33
      %s35 = sshll.u32 [#allocation6], 4
      %s36 = int_to_ptr.vmem [resolvable:$true] %s35
      %41 = dma.hbm_to_vmem [thread:$0]  %s1, 512, %s36, [#allocation7], 128, 128, 8
    $region9: #{tpu_custom_call.1} parent=1 // pred_fallthru
      _
    // Predicated region
    $region10: #{tpu_custom_call.1} parent=1 // pred_check
      _
    $region11: #{tpu_custom_call.1} parent=1 // pred_check_branch
      %43 = sbr.rel (0) target = $region13
    $region12: #{tpu_custom_call.1} parent=1 // pred_region
      %s45 = ssub.s32 512, 512
      %46 = vsyncadd [#allocation7], %s45
      %s47 = sshll.u32 [#allocation8], 4
      %s48 = int_to_ptr.vmem [resolvable:$true] %s47
      %53 = dma.hbm_to_vmem [thread:$0]  %s2, 512, %s48, [#allocation7], 128, 128, 8
    $region13: #{tpu_custom_call.1} parent=1 // pred_fallthru
      _
    // Predicated region
    $region14: #{tpu_custom_call.1} parent=1 // pred_check
      _
    $region15: #{tpu_custom_call.1} parent=1 // pred_check_branch
      %55 = sbr.rel (0) target = $region17
    $region16: #{tpu_custom_call.1} parent=1 // pred_region
      %s57 = ssub.s32 256, 256
      %58 = vsyncadd [#allocation10], %s57
      %s59 = sshll.u32 [#allocation9], 4
      %s60 = int_to_ptr.vmem [resolvable:$true] %s59
      %65 = dma.hbm_to_vmem [thread:$0]  %s3, 256, %s60, [#allocation10], 128, 128, 8
    $region17: #{tpu_custom_call.1} parent=1 // pred_fallthru
      _
    // Predicated region
    $region18: #{tpu_custom_call.1} parent=1 // pred_check
      _
    $region19: #{tpu_custom_call.1} parent=1 // pred_check_branch
      %67 = sbr.rel (0) target = $region21
    $region20: #{tpu_custom_call.1} parent=1 // pred_region
      %s69 = ssub.s32 256, 256
      %70 = vsyncadd [#allocation10], %s69
      %s71 = sshll.u32 [#allocation11], 4
      %s72 = int_to_ptr.vmem [resolvable:$true] %s71
      %77 = dma.hbm_to_vmem [thread:$0]  %s4, 256, %s72, [#allocation10], 128, 128, 8
    $region21: #{tpu_custom_call.1} parent=1 // pred_fallthru
      _
    // Predicated region
    $region22: #{tpu_custom_call.1} parent=1 // pred_check
      _
    $region23: #{tpu_custom_call.1} parent=1 // pred_check_branch
      %79 = sbr.rel (0) target = $region25
    $region24: #{tpu_custom_call.1} parent=1 // pred_region
      %s81 = ssub.s32 16, 16
      %82 = vsyncadd [#allocation13], %s81
      %s84 = sshll.u32 [#allocation12], 4
      %s85 = int_to_ptr.vmem [resolvable:$true] %s84
      %87 = dma.hbm_to_vmem [thread:$0]  %s5, 16, %s85, [#allocation13]
    $region25: #{tpu_custom_call.1} parent=1 // pred_fallthru
      _
    // Predicated region
    $region26: #{tpu_custom_call.1} parent=1 // pred_check
      _
    $region27: #{tpu_custom_call.1} parent=1 // pred_check_branch
      %89 = sbr.rel (0) target = $region29
    $region28: #{tpu_custom_call.1} parent=1 // pred_region
      _
    $region29: #{tpu_custom_call.1} parent=1 // pred_fallthru
      _
    // Predicated region
    $region30: #{tpu_custom_call.1} parent=1 // pred_check
      _
    $region31: #{tpu_custom_call.1} parent=1 // pred_check_branch
      %91 = sbr.rel (0) target = $region33
    $region32: #{tpu_custom_call.1} parent=1 // pred_region
      %92 = dma.done [#allocation4], 256
    $region33: #{tpu_custom_call.1} parent=1 // pred_fallthru
      _
    // Predicated region
    $region34: #{tpu_custom_call.1} parent=1 // pred_check
      _
    $region35: #{tpu_custom_call.1} parent=1 // pred_check_branch
      %94 = sbr.rel (0) target = $region37
    $region36: #{tpu_custom_call.1} parent=1 // pred_region
      %95 = dma.done [#allocation7], 512
    $region37: #{tpu_custom_call.1} parent=1 // pred_fallthru
      _
    // Predicated region
    $region38: #{tpu_custom_call.1} parent=1 // pred_check
      _
    $region39: #{tpu_custom_call.1} parent=1 // pred_check_branch
      %97 = sbr.rel (0) target = $region41
    $region40: #{tpu_custom_call.1} parent=1 // pred_region
      %98 = dma.done [#allocation7], 512
    $region41: #{tpu_custom_call.1} parent=1 // pred_fallthru
      _
    // Predicated region
    $region42: #{tpu_custom_call.1} parent=1 // pred_check
      _
    $region43: #{tpu_custom_call.1} parent=1 // pred_check_branch
      %100 = sbr.rel (0) target = $region45
    $region44: #{tpu_custom_call.1} parent=1 // pred_region
      %101 = dma.done [#allocation10], 256
    $region45: #{tpu_custom_call.1} parent=1 // pred_fallthru
      _
    // Predicated region
    $region46: #{tpu_custom_call.1} parent=1 // pred_check
      _
    $region47: #{tpu_custom_call.1} parent=1 // pred_check_branch
      %103 = sbr.rel (0) target = $region49
    $region48: #{tpu_custom_call.1} parent=1 // pred_region
      %104 = dma.done [#allocation10], 256
    $region49: #{tpu_custom_call.1} parent=1 // pred_fallthru
      _
    // Predicated region
    $region50: #{tpu_custom_call.1} parent=1 // pred_check
      _
    $region51: #{tpu_custom_call.1} parent=1 // pred_check_branch
      %106 = sbr.rel (0) target = $region53
    $region52: #{tpu_custom_call.1} parent=1 // pred_region
      %107 = dma.done [#allocation13], 16
    $region53: #{tpu_custom_call.1} parent=1 // pred_fallthru
      _
    %v108 = vld [vmem:[#allocation3] sm:$0xff]
    %v109 = vld [vmem:[#allocation3 + $0x8] sm:$0xff]
    %v110 = vld [vmem:[#allocation6] sm:$0xff]
    %v111 = vld [vmem:[#allocation6 + $0x8] sm:$0xff]
    %v112 = vld [vmem:[#allocation6 + $0x10] sm:$0xff]
    %v113 = vld [vmem:[#allocation6 + $0x18] sm:$0xff]
    %v114 = vld [vmem:[#allocation8] sm:$0xff]
    %v115 = vld [vmem:[#allocation8 + $0x8] sm:$0xff]
    %v116 = vld [vmem:[#allocation8 + $0x10] sm:$0xff]
    %v117 = vld [vmem:[#allocation8 + $0x18] sm:$0xff]
    %119 = vset.pattern.permute.xlu0 0
    %120 = vperm.xlu0 %119, %v114
    %v121 = vpop.permute.xlu0 %120
    %124 = vset.pattern.permute.xlu0 0
    %125 = vperm.xlu0 %124, %v115
    %v126 = vpop.permute.xlu0 %125
    %129 = vset.pattern.permute.xlu0 0
    %130 = vperm.xlu0 %129, %v116
    %v131 = vpop.permute.xlu0 %130
    %134 = vset.pattern.permute.xlu0 0
    %135 = vperm.xlu0 %134, %v117
    %v136 = vpop.permute.xlu0 %135
    %vm138 = vcmask 261120
    %v140 = vsel %vm138, %v110, 0
    %v143 = vsel %vm138, %v111, 0
    %v146 = vsel %vm138, %v112, 0
    %v149 = vsel %vm138, %v113, 0
    %v152 = vsel %vm138, %v108, 0
    %v155 = vsel %vm138, %v109, 0
    %157 = vmatprep.subr.mxu0 0.0
    %158 = vmatpush1.xpose.msra.mxu0 %v152
    %159 = vmatprep.subr.mxu0 0.0
    %160 = vmatpush1.xpose.msra.mxu0 %v155
    %161 = vmatprep.subr.mxu0 0.0
    %162 = vmatpush1.xpose.msra.mxu0 0.0
    %163 = vmatprep.subr.mxu0 0.0
    %164 = vmatpush1.xpose.msra.mxu0 0.0
    %165 = vmatprep.subr.mxu0 0.0
    %166 = vmatpush1.xpose.msra.mxu0 0.0
    %167 = vmatprep.subr.mxu0 0.0
    %168 = vmatpush1.xpose.msra.mxu0 0.0
    %169 = vmatprep.subr.mxu0 0.0
    %170 = vmatpush1.xpose.msra.mxu0 0.0
    %171 = vmatprep.subr.mxu0 0.0
    %172 = vmatpush1.xpose.msra.mxu0 0.0
    %173 = vmatprep.subr.mxu0 0.0
    %174 = vmatpush1.xpose.msra.mxu0 0.0
    %175 = vmatprep.subr.mxu0 0.0
    %176 = vmatpush1.xpose.msra.mxu0 0.0
    %177 = vmatprep.subr.mxu0 0.0
    %178 = vmatpush1.xpose.msra.mxu0 0.0
    %179 = vmatprep.subr.mxu0 0.0
    %180 = vmatpush1.xpose.msra.mxu0 0.0
    %181 = vmatprep.subr.mxu0 0.0
    %182 = vmatpush1.xpose.msra.mxu0 0.0
    %183 = vmatprep.subr.mxu0 0.0
    %184 = vmatpush1.xpose.msra.mxu0 0.0
    %185 = vmatprep.subr.mxu0 0.0
    %186 = vmatpush1.xpose.msra.mxu0 0.0
    %187 = vmatprep.subr.mxu0 0.0
    %188 = vmatpush1.xpose.msra.mxu0 0.0
    %189 = vmatprep.subr.mxu0 0.0
    %190 = vmatpush1.xpose.msra.mxu0 0.0
    %191 = vmatprep.subr.mxu0 0.0
    %192 = vmatpush1.xpose.msra.mxu0 0.0
    %193 = vmatprep.subr.mxu0 0.0
    %194 = vmatpush1.xpose.msra.mxu0 0.0
    %195 = vmatprep.subr.mxu0 0.0
    %196 = vmatpush1.xpose.msra.mxu0 0.0
    %197 = vmatprep.subr.mxu0 0.0
    %198 = vmatpush1.xpose.msra.mxu0 0.0
    %199 = vmatprep.subr.mxu0 0.0
    %200 = vmatpush1.xpose.msra.mxu0 0.0
    %201 = vmatprep.subr.mxu0 0.0
    %202 = vmatpush1.xpose.msra.mxu0 0.0
    %203 = vmatprep.subr.mxu0 0.0
    %204 = vmatpush1.xpose.msra.mxu0 0.0
    %205 = vmatprep.subr.mxu0 0.0
    %206 = vmatpush1.xpose.msra.mxu0 0.0
    %207 = vmatprep.subr.mxu0 0.0
    %208 = vmatpush1.xpose.msra.mxu0 0.0
    %209 = vmatprep.subr.mxu0 0.0
    %210 = vmatpush1.xpose.msra.mxu0 0.0
    %211 = vmatprep.subr.mxu0 0.0
    %212 = vmatpush1.xpose.msra.mxu0 0.0
    %213 = vmatprep.subr.mxu0 0.0
    %214 = vmatpush1.xpose.msra.mxu0 0.0
    %215 = vmatprep.subr.mxu0 0.0
    %216 = vmatpush1.xpose.msra.mxu0 0.0
    %217 = vmatprep.subr.mxu0 0.0
    %218 = vmatpush1.xpose.msra.mxu0 0.0
    %219 = vmatprep.subr.mxu0 0.0
    %220 = vmatpush1.xpose.msra.mxu0 0.0
    %221 = vmatprep.mubr.f32.mxu0 0.0
    %222 = vmatmul.mubr.f32.gmra.mrb[0].mxu0 %v140
    %v223 = vpop.f32.mrb[0].mxu0
    %v224 = vadd.f32 %v121, %v223
    %v225 = vpop.f32.mrb[0].mxu0
    %226 = vmatprep.mubr.f32.mxu0 0.0
    %227 = vmatmul.mubr.f32.gmra.mrb[0].mxu0 %v143
    %v228 = vpop.f32.mrb[0].mxu0
    %v229 = vadd.f32 %v126, %v228
    %v230 = vpop.f32.mrb[0].mxu0
    %231 = vmatprep.mubr.f32.mxu0 0.0
    %232 = vmatmul.mubr.f32.gmra.mrb[0].mxu0 %v146
    %v233 = vpop.f32.mrb[0].mxu0
    %v234 = vadd.f32 %v131, %v233
    %v235 = vpop.f32.mrb[0].mxu0
    %236 = vmatprep.mubr.f32.mxu0 0.0
    %237 = vmatmul.mubr.f32.gmra.mrb[0].mxu0 %v149
    %v238 = vpop.f32.mrb[0].mxu0
    %v239 = vadd.f32 %v136, %v238
    %v240 = vpop.f32.mrb[0].mxu0
    %241 = vdwg.mxu0
    %v242 = vmin.f32 %v224, 30.0
    %v243 = vmin.f32 %v229, 30.0
    %v244 = vmin.f32 %v234, 30.0
    %v245 = vmin.f32 %v239, 30.0
    %v246 = vmul.f32 %v242, 1.442695
    %v247 = vpow.pop %v246
    %v248 = vmul.f32 %v243, 1.442695
    %v249 = vpow.pop %v248
    %v250 = vmul.f32 %v244, 1.442695
    %v251 = vpow.pop %v250
    %v252 = vmul.f32 %v245, 1.442695
    %v253 = vpow.pop %v252
    %v254 = vadd.f32 %v247, 1.0
    %v255 = vadd.f32 %v249, 1.0
    %v256 = vadd.f32 %v251, 1.0
    %v257 = vadd.f32 %v253, 1.0
    %v258 = vmul.f32 %v254, %v254
    %v259 = vmul.f32 %v255, %v255
    %v260 = vmul.f32 %v256, %v256
    %v261 = vmul.f32 %v257, %v257
    %v262 = vadd.f32 %v258, 1.0
    %v263 = vadd.f32 %v259, 1.0
    %v264 = vadd.f32 %v260, 1.0
    %v265 = vadd.f32 %v261, 1.0
    %v266 = vrcp.pop %v262
    %v267 = vmul.f32 2.0, %v266
    %v268 = vrcp.pop %v263
    %v269 = vmul.f32 2.0, %v268
    %v270 = vrcp.pop %v264
    %v271 = vmul.f32 2.0, %v270
    %v272 = vrcp.pop %v265
    %v273 = vmul.f32 2.0, %v272
    %v274 = vsub.f32 1.0, %v267
    %v275 = vsub.f32 1.0, %v269
    %v276 = vsub.f32 1.0, %v271
    %v277 = vsub.f32 1.0, %v273
    %v278 = vmul.f32 %v224, %v274
    %v279 = vmul.f32 %v229, %v275
    %v280 = vmul.f32 %v234, %v276
    %v281 = vmul.f32 %v239, %v277
    %v282 = vld [vmem:[#allocation9] sm:$0xff]
    %v283 = vld [vmem:[#allocation9 + $0x8] sm:$0xff]
    %v284 = vld [vmem:[#allocation11] sm:$0xff]
    %v285 = vld [vmem:[#allocation11 + $0x8] sm:$0xff]
    %287 = vset.pattern.permute.xlu0 0
    %288 = vperm.xlu0 %287, %v284
    %v289 = vpop.permute.xlu0 %288
    %292 = vset.pattern.permute.xlu0 0
    %293 = vperm.xlu0 %292, %v285
    %v294 = vpop.permute.xlu0 %293
    %v297 = vsel %vm138, %v282, 0
    %v300 = vsel %vm138, %v283, 0
    %302 = vmatprep.subr.mxu0 0.0
    %303 = vmatpush1.msra.mxu0 %v278
    %304 = vmatprep.subr.mxu0 0.0
    %305 = vmatpush1.msra.mxu0 %v279
    %306 = vmatprep.subr.mxu0 0.0
    %307 = vmatpush1.msra.mxu0 %v280
    %308 = vmatprep.subr.mxu0 0.0
    %309 = vmatpush1.msra.mxu0 %v281
    %310 = vmatprep.subr.mxu0 0.0
    %311 = vmatpush1.msra.mxu0 0.0
    %312 = vmatprep.subr.mxu0 0.0
    %313 = vmatpush1.msra.mxu0 0.0
    %314 = vmatprep.subr.mxu0 0.0
    %315 = vmatpush1.msra.mxu0 0.0
    %316 = vmatprep.subr.mxu0 0.0
    %317 = vmatpush1.msra.mxu0 0.0
    %318 = vmatprep.subr.mxu0 0.0
    %319 = vmatpush1.msra.mxu0 0.0
    %320 = vmatprep.subr.mxu0 0.0
    %321 = vmatpush1.msra.mxu0 0.0
    %322 = vmatprep.subr.mxu0 0.0
    %323 = vmatpush1.msra.mxu0 0.0
    %324 = vmatprep.subr.mxu0 0.0
    %325 = vmatpush1.msra.mxu0 0.0
    %326 = vmatprep.subr.mxu0 0.0
    %327 = vmatpush1.msra.mxu0 0.0
    %328 = vmatprep.subr.mxu0 0.0
    %329 = vmatpush1.msra.mxu0 0.0
    %330 = vmatprep.subr.mxu0 0.0
    %331 = vmatpush1.msra.mxu0 0.0
    %332 = vmatprep.subr.mxu0 0.0
    %333 = vmatpush1.msra.mxu0 0.0
    %334 = vmatprep.subr.mxu0 0.0
    %335 = vmatpush1.msra.mxu0 0.0
    %336 = vmatprep.subr.mxu0 0.0
    %337 = vmatpush1.msra.mxu0 0.0
    %338 = vmatprep.subr.mxu0 0.0
    %339 = vmatpush1.msra.mxu0 0.0
    %340 = vmatprep.subr.mxu0 0.0
    %341 = vmatpush1.msra.mxu0 0.0
    %342 = vmatprep.subr.mxu0 0.0
    %343 = vmatpush1.msra.mxu0 0.0
    %344 = vmatprep.subr.mxu0 0.0
    %345 = vmatpush1.msra.mxu0 0.0
    %346 = vmatprep.subr.mxu0 0.0
    %347 = vmatpush1.msra.mxu0 0.0
    %348 = vmatprep.subr.mxu0 0.0
    %349 = vmatpush1.msra.mxu0 0.0
    %350 = vmatprep.subr.mxu0 0.0
    %351 = vmatpush1.msra.mxu0 0.0
    %352 = vmatprep.subr.mxu0 0.0
    %353 = vmatpush1.msra.mxu0 0.0
    %354 = vmatprep.subr.mxu0 0.0
    %355 = vmatpush1.msra.mxu0 0.0
    %356 = vmatprep.subr.mxu0 0.0
    %357 = vmatpush1.msra.mxu0 0.0
    %358 = vmatprep.subr.mxu0 0.0
    %359 = vmatpush1.msra.mxu0 0.0
    %360 = vmatprep.subr.mxu0 0.0
    %361 = vmatpush1.msra.mxu0 0.0
    %362 = vmatprep.subr.mxu0 0.0
    %363 = vmatpush1.msra.mxu0 0.0
    %364 = vmatprep.subr.mxu0 0.0
    %365 = vmatpush1.msra.mxu0 0.0
    %366 = vmatprep.mubr.f32.mxu0 0.0
    %367 = vmatmul.mubr.f32.gmra.mrb[0].mxu0 %v297
    %v368 = vpop.f32.mrb[0].mxu0
    %v369 = vadd.f32 %v289, %v368
    %v370 = vpop.f32.mrb[0].mxu0
    %371 = vmatprep.mubr.f32.mxu0 0.0
    %372 = vmatmul.mubr.f32.gmra.mrb[0].mxu0 %v300
    %v373 = vpop.f32.mrb[0].mxu0
    %v374 = vadd.f32 %v294, %v373
    %v375 = vpop.f32.mrb[0].mxu0
    %376 = vdwg.mxu0
    %v377 = vmin.f32 %v369, 30.0
    %v378 = vmin.f32 %v374, 30.0
    %v379 = vmul.f32 %v377, 1.442695
    %v380 = vpow.pop %v379
    %v381 = vmul.f32 %v378, 1.442695
    %v382 = vpow.pop %v381
    %v383 = vadd.f32 %v380, 1.0
    %v384 = vadd.f32 %v382, 1.0
    %v385 = vmul.f32 %v383, %v383
    %v386 = vmul.f32 %v384, %v384
    %v387 = vadd.f32 %v385, 1.0
    %v388 = vadd.f32 %v386, 1.0
    %v389 = vrcp.pop %v387
    %v390 = vmul.f32 2.0, %v389
    %v391 = vrcp.pop %v388
    %v392 = vmul.f32 2.0, %v391
    %v393 = vsub.f32 1.0, %v390
    %v394 = vsub.f32 1.0, %v392
    %v395 = vmul.f32 %v369, %v393
    %v396 = vmul.f32 %v374, %v394
    %v397 = vld [vmem:[#allocation12] sm:$0x1]
    %s398 = sld [smem:[#allocation2]]
    %v399 = vstv %s398
    %vm400 = vcmask 130048
    %v402 = vsel %vm400, %v397, 0
    %404 = vmatprep.subr.mxu0 0.0
    %405 = vmatpush1.msra.mxu0 %v395
    %406 = vmatprep.subr.mxu0 0.0
    %407 = vmatpush1.msra.mxu0 %v396
    %408 = vmatprep.subr.mxu0 0.0
    %409 = vmatpush1.msra.mxu0 0.0
    %410 = vmatprep.subr.mxu0 0.0
    %411 = vmatpush1.msra.mxu0 0.0
    %412 = vmatprep.subr.mxu0 0.0
    %413 = vmatpush1.msra.mxu0 0.0
    %414 = vmatprep.subr.mxu0 0.0
    %415 = vmatpush1.msra.mxu0 0.0
    %416 = vmatprep.subr.mxu0 0.0
    %417 = vmatpush1.msra.mxu0 0.0
    %418 = vmatprep.subr.mxu0 0.0
    %419 = vmatpush1.msra.mxu0 0.0
    %420 = vmatprep.subr.mxu0 0.0
    %421 = vmatpush1.msra.mxu0 0.0
    %422 = vmatprep.subr.mxu0 0.0
    %423 = vmatpush1.msra.mxu0 0.0
    %424 = vmatprep.subr.mxu0 0.0
    %425 = vmatpush1.msra.mxu0 0.0
    %426 = vmatprep.subr.mxu0 0.0
    %427 = vmatpush1.msra.mxu0 0.0
    %428 = vmatprep.subr.mxu0 0.0
    %429 = vmatpush1.msra.mxu0 0.0
    %430 = vmatprep.subr.mxu0 0.0
    %431 = vmatpush1.msra.mxu0 0.0
    %432 = vmatprep.subr.mxu0 0.0
    %433 = vmatpush1.msra.mxu0 0.0
    %434 = vmatprep.subr.mxu0 0.0
    %435 = vmatpush1.msra.mxu0 0.0
    %436 = vmatprep.subr.mxu0 0.0
    %437 = vmatpush1.msra.mxu0 0.0
    %438 = vmatprep.subr.mxu0 0.0
    %439 = vmatpush1.msra.mxu0 0.0
    %440 = vmatprep.subr.mxu0 0.0
    %441 = vmatpush1.msra.mxu0 0.0
    %442 = vmatprep.subr.mxu0 0.0
    %443 = vmatpush1.msra.mxu0 0.0
    %444 = vmatprep.subr.mxu0 0.0
    %445 = vmatpush1.msra.mxu0 0.0
    %446 = vmatprep.subr.mxu0 0.0
    %447 = vmatpush1.msra.mxu0 0.0
    %448 = vmatprep.subr.mxu0 0.0
    %449 = vmatpush1.msra.mxu0 0.0
    %450 = vmatprep.subr.mxu0 0.0
    %451 = vmatpush1.msra.mxu0 0.0
    %452 = vmatprep.subr.mxu0 0.0
    %453 = vmatpush1.msra.mxu0 0.0
    %454 = vmatprep.subr.mxu0 0.0
    %455 = vmatpush1.msra.mxu0 0.0
    %456 = vmatprep.subr.mxu0 0.0
    %457 = vmatpush1.msra.mxu0 0.0
    %458 = vmatprep.subr.mxu0 0.0
    %459 = vmatpush1.msra.mxu0 0.0
    %460 = vmatprep.subr.mxu0 0.0
    %461 = vmatpush1.msra.mxu0 0.0
    %462 = vmatprep.subr.mxu0 0.0
    %463 = vmatpush1.msra.mxu0 0.0
    %464 = vmatprep.subr.mxu0 0.0
    %465 = vmatpush1.msra.mxu0 0.0
    %466 = vmatprep.subr.mxu0 0.0
    %467 = vmatpush1.msra.mxu0 0.0
    %468 = vmatprep.mubr.f32.mxu0 0.0
    %469 = vmatmul.mubr.f32.gmra.mrb[0].mxu0 %v402
    %v470 = vpop.f32.mrb[0].mxu0
    %v471 = vadd.f32 %v399, %v470
    %v472 = vpop.f32.mrb[0].mxu0
    %473 = vdwg.mxu0
    %v474 = vsub.f32 0.0, %v471
    %v475 = vmin.f32 %v474, 30.0
    %v476 = vmul.f32 %v475, 1.442695
    %v477 = vpow.pop %v476
    %v478 = vadd.f32 %v477, 1.0
    %v479 = vrcp.pop %v478
    %vm480 = vcmask 122880
    %481 = vst.msk [vmem:[#allocation14] sm:$0x1] %vm480, %v479
    // Predicated region
    $region54: #{tpu_custom_call.1} parent=1 // pred_check
      _
    $region55: #{tpu_custom_call.1} parent=1 // pred_check_branch
      %483 = sbr.rel (0) target = $region57
    $region56: #{tpu_custom_call.1} parent=1 // pred_region
      %s485 = ssub.s32 16, 16
      %486 = vsyncadd [#allocation5], %s485
      %s488 = sshll.u32 [#allocation14], 4
      %s489 = int_to_ptr.vmem [resolvable:$true] %s488
      %491 = dma.vmem_to_hbm [thread:$0]  %s489, 16, %s7, [#allocation5]
    $region57: #{tpu_custom_call.1} parent=1 // pred_fallthru
      _
    // Predicated region
    $region58: #{tpu_custom_call.1} parent=1 // pred_check
      _
    $region59: #{tpu_custom_call.1} parent=1 // pred_check_branch
      %493 = sbr.rel (0) target = $region61
    $region60: #{tpu_custom_call.1} parent=1 // pred_region
      %494 = dma.done [#allocation5], 16
    $region61: #{tpu_custom_call.1} parent=1 // pred_fallthru
      _
    %495 = vsyncpa [#allocation4], 1
    %496 = vsyncpa [#allocation7], 1
    %497 = vsyncpa [#allocation10], 1
    %498 = vsyncpa [#allocation13], 1
    %499 = vsyncpa [#allocation5], 1

</llo_original>
